<compile_context>
chip_gen: v7x
topology: tpu7x:2x2x1
jax: 0.10.0
libtpu: 0.0.40
codegen_flags: <defaults>
</compile_context>

<pallas_src>
import math

import jax
import jax.numpy as jnp
from jax import lax
from jax.experimental import pallas as pl
from jax.experimental.pallas import tpu as pltpu


def _round_up(x, m):
    return ((x + m - 1) // m) * m


_VMEM_TILE_BUDGET = 20 << 20   # conservative block budget across v5e/v6e/v7x


def _pick_tiles(M, K, Np, bytes_x, bytes_w, bytes_o, budget=_VMEM_TILE_BUDGET):
    """Choose (tm, tn, gn, single_buffer_resident_weight)."""
    # Keep the whole (padded) weight VMEM-resident only while it is small;
    # otherwise tile N (mandatory for large N on v7x's 64 MiB VMEM and against
    # the 16/32 MiB default scoped limits on v5e/v6e).
    w_resident = Np * K * bytes_w
    if w_resident <= budget // 3:
        tn, gn, single_buffer = Np, 1, True
    else:
        tn = 128
        for cand in (512, 256, 128):   # 256-multiples feed the 256-wide v6e/v7x MXU
            if Np % cand == 0:
                tn = cand
                break
        gn, single_buffer = Np // tn, False

    w_block = (1 if single_buffer else 2) * tn * K * bytes_w
    b_block = (1 if single_buffer else 2) * tn * 4

    # Largest row tile (multiple of 16 for bf16 sublane packing) whose
    # double-buffered x/out blocks still fit the budget; large tiles amortize
    # the ~0.35us per-grid-step overhead when K/N are small.
    tm = min(2048, _round_up(max(M, 1), 16))
    while tm > 16:
        need = 2 * tm * K * bytes_x + 2 * tm * tn * bytes_o + w_block + b_block
        if need <= budget:
            break
        tm = max(16, _round_up(tm // 2, 16))
    return tm, tn, gn, single_buffer


def _build_call(x2, w_p, b_p, *, M, K, Np, tm, tn, gn, compute_dtype,
                out_dtype, single_buffer_resident, vmem_limit, cost):
    gm = pl.cdiv(M, tm)

    def kernel(x_ref, w_ref, b_ref, o_ref):
        xv = x_ref[...]
        if xv.dtype != compute_dtype:
            xv = xv.astype(compute_dtype)          # cast at the MXU, not in HBM
        # x: (tm, K), w: (tn, K) -> contract K of both (== x @ w.T) on the MXU.
        acc = lax.dot_general(
            xv, w_ref[...],
            dimension_numbers=(((1,), (1,)), ((), ())),
            preferred_element_type=jnp.float32)
        o_ref[...] = (acc + b_ref[...]).astype(o_ref.dtype)

    if single_buffer_resident:
        # Grid-invariant blocks: a single VMEM buffer is enough.
        w_spec = pl.BlockSpec((tn, K), lambda i, j: (j, 0),
                              pipeline_mode=pl.Buffered(1))
        b_spec = pl.BlockSpec((1, tn), lambda i, j: (0, j),
                              pipeline_mode=pl.Buffered(1))
    else:
        w_spec = pl.BlockSpec((tn, K), lambda i, j: (j, 0))
        b_spec = pl.BlockSpec((1, tn), lambda i, j: (0, j))

    return pl.pallas_call(
        kernel,
        out_shape=jax.ShapeDtypeStruct((M, Np), out_dtype),
        grid_spec=pltpu.PrefetchScalarGridSpec(
            num_scalar_prefetch=0,
            grid=(gm, gn),
            in_specs=[
                pl.BlockSpec((tm, K), lambda i, j: (i, 0)),   # row tile of x
                w_spec,                                       # weight (N, K) tile
                b_spec,                                       # bias row tile
            ],
            out_specs=pl.BlockSpec((tm, tn), lambda i, j: (i, j)),
        ),
        compiler_params=pltpu.CompilerParams(
            dimension_semantics=("parallel", "parallel"),
            vmem_limit_bytes=vmem_limit),
        cost_estimate=cost,
    )(x2, w_p, b_p)


def zero_weight_linear_forward(x, weight, bias, *, compute_dtype=jnp.bfloat16):
    """Forward of ZeroWeightLinear: x @ weight.T + bias (nn.Linear semantics).

    x       : (..., in_features)        (output keeps this dtype)
    weight  : (out_features, in_features)
    bias    : (out_features,)
    compute_dtype : MXU operand dtype (bf16 by default; f32 accumulation is
                    always used, pass jnp.float32 for exact math).
    """
    compute_dtype = jnp.dtype(compute_dtype)
    lead = x.shape[:-1]
    K = x.shape[-1]
    N = weight.shape[0]
    out_dtype = x.dtype                      # nn.Linear keeps the activation dtype

    x2 = x.reshape(-1, K)                    # no dtype cast, no K padding
    M = x2.shape[0]

    # Only the output-feature axis is padded (to a multiple of 128) so output
    # stores are lane-dense; the contraction axis K is never tiled, so it needs
    # no zero padding at all.
    Np = _round_up(N, 128)

    w = jnp.asarray(weight)
    if w.dtype != compute_dtype:
        w = w.astype(compute_dtype)          # cast once, outside the grid loop
    if Np != N:
        w = jnp.zeros((Np, K), compute_dtype).at[:N, :].set(w)
    b = jnp.asarray(bias, jnp.float32).reshape(1, N)
    if Np != N:
        b = jnp.zeros((1, Np), jnp.float32).at[:, :N].set(b)

    bytes_x = jnp.dtype(x2.dtype).itemsize
    bytes_w = compute_dtype.itemsize
    bytes_o = jnp.dtype(out_dtype).itemsize

    tm, tn, gn, single_buffer = _pick_tiles(M, K, Np, bytes_x, bytes_w, bytes_o)

    # Scoped-VMEM request from actual block bytes (assume double buffering for
    # slack); the 16 MiB (v5e) / 32 MiB (v6e, v7x) defaults are hit long before
    # physical VMEM otherwise.
    need = (2 * tm * K * bytes_x + 2 * tm * tn * bytes_o
            + 2 * tn * K * bytes_w + 2 * tn * 4)
    vmem_limit = int(min(64 << 20, max(16 << 20, need + need // 4 + (1 << 20))))

    cost = pl.CostEstimate(
        flops=2 * M * K * Np,
        transcendentals=0,
        bytes_accessed=(M * K * bytes_x + Np * K * bytes_w + Np * 4
                        + M * Np * bytes_o))

    kwargs = dict(M=M, K=K, Np=Np, tm=tm, tn=tn, gn=gn,
                  compute_dtype=compute_dtype, out_dtype=out_dtype,
                  vmem_limit=vmem_limit, cost=cost)
    if single_buffer:
        try:
            out = _build_call(x2, w, b, single_buffer_resident=True, **kwargs)
        except Exception:
            # Fallback for jax builds that reject Buffered(1) single-buffering.
            out = _build_call(x2, w, b, single_buffer_resident=False, **kwargs)
    else:
        out = _build_call(x2, w, b, single_buffer_resident=False, **kwargs)

    if Np != N:
        out = out[:, :N]
    return out.reshape(lead + (N,))


def _reference_forward(x, weight, bias):
    """Pure-JAX reference: PyTorch nn.Linear forward (f32)."""
    return x @ jnp.asarray(weight).T + jnp.asarray(bias)


if __name__ == "__main__":
    # Small shapes consistent with the module: a (batch, seq, in_features)
    # activation through a 32 -> 16 ZeroWeightLinear (out_features a perfect
    # square so bias_mode='qr' is well defined: channels = sqrt(16) = 4).
    batch, seq, in_features, out_features = 2, 8, 32, 16

    key = jax.random.PRNGKey(0)
    k_x, k_q, k_w = jax.random.split(key, 3)

    # --- Module init (host-side, matches ZeroWeightLinear.__init__) ---
    weight = jnp.zeros((out_features, in_features), jnp.float32)   # weight.data.zero_()
    channels = int(math.isqrt(out_features))
    q, _ = jnp.linalg.qr(jax.random.normal(k_q, (channels, channels), jnp.float32))
    bias_qr = q.reshape(-1)                                        # bias_mode='qr'
    bias_zero = jnp.zeros((out_features,), jnp.float32)            # bias_mode='zero'
    # TODO(synk): bias_mode='data_zero' only registers an 'initialized' buffer
    # (no forward effect), so it is not represented in the kernel.

    x = jax.random.normal(k_x, (batch, seq, in_features), jnp.float32)

    # Forward with the module's actual parameters (zero weight, qr bias):
    # result must equal the broadcast bias exactly (bias add is done in f32).
    out = jax.block_until_ready(zero_weight_linear_forward(x, weight, bias_qr))
    ref = _reference_forward(x, weight, bias_qr)
    assert out.shape == (batch, seq, out_features), out.shape
    assert out.dtype == x.dtype, out.dtype
    assert jnp.allclose(out, ref, atol=1e-6), float(jnp.max(jnp.abs(out - ref)))

    # bias_mode='zero'.
    out_z = jax.block_until_ready(zero_weight_linear_forward(x, weight, bias_zero))
    assert jnp.allclose(out_z, jnp.zeros_like(out_z), atol=1e-6)

    # Non-zero weight (same forward path once training has updated the
    # zero-initialized weight).  Default bf16 MXU operands -> loose tolerance
    # vs. the f32 reference.
    w_nz = 0.1 * jax.random.normal(k_w, (out_features, in_features), jnp.float32)
    out_nz = jax.block_until_ready(zero_weight_linear_forward(x, w_nz, bias_qr))
    ref_nz = _reference_forward(x, w_nz, bias_qr)
    assert jnp.allclose(out_nz, ref_nz, atol=3e-2, rtol=3e-2), \
        float(jnp.max(jnp.abs(out_nz - ref_nz)))

    # Exact-math path (f32 MXU operands) for a tight correctness check.
    out_f32 = jax.block_until_ready(
        zero_weight_linear_forward(x, w_nz, bias_qr, compute_dtype=jnp.float32))
    assert jnp.allclose(out_f32, ref_nz, atol=1e-5, rtol=1e-5), \
        float(jnp.max(jnp.abs(out_f32 - ref_nz)))

    print("KERNEL_OK")
</pallas_src>

<mosaic_0001>
module attributes {stable_mosaic.version = 11 : i64} {
  func.func @kernel(%arg0: i32, %arg1: i32, %arg2: memref<16x32xf32, #tpu.memory_space<vmem>>, %arg3: memref<128x32xbf16, #tpu.memory_space<vmem>>, %arg4: memref<1x128xf32, #tpu.memory_space<vmem>>, %arg5: memref<16x128xf32, #tpu.memory_space<vmem>>) attributes {dimension_semantics = [#tpu.dimension_semantics<parallel>, #tpu.dimension_semantics<parallel>], iteration_bounds = array<i64: 1, 1>, scalar_prefetch = 0 : i64, scratch_operands = 0 : i64, tpu.core_type = #tpu.core_type<tc>, window_params = [{transform_indices = @transform_0, window_bounds = array<i64: 16, 32>}, {pipeline_mode = #tpu.pipeline_mode<synchronous>, transform_indices = @transform_1, window_bounds = array<i64: 128, 32>}, {pipeline_mode = #tpu.pipeline_mode<synchronous>, transform_indices = @transform_2, window_bounds = array<i64: 1, 128>}, {transform_indices = @transform_3, window_bounds = array<i64: 16, 128>}]} {
    %c0 = arith.constant 0 : index
    %c0_0 = arith.constant 0 : index
    %0 = vector.load %arg2[%c0, %c0_0] : memref<16x32xf32, #tpu.memory_space<vmem>>, vector<16x32xf32>
    %1 = arith.truncf %0 : vector<16x32xf32> to vector<16x32xbf16>
    %c0_1 = arith.constant 0 : index
    %c0_2 = arith.constant 0 : index
    %2 = vector.load %arg3[%c0_1, %c0_2] : memref<128x32xbf16, #tpu.memory_space<vmem>>, vector<128x32xbf16>
    %cst = arith.constant dense<0.000000e+00> : vector<16x128xf32>
    %3 = tpu.matmul %1, %2, %cst {dimension_numbers = #tpu.dot_dimension_numbers<[1], [1], [0], [0], [0, 0, 1, 0], [], []>} : vector<16x32xbf16>, vector<128x32xbf16>, vector<16x128xf32> -> vector<16x128xf32>
    %c0_3 = arith.constant 0 : index
    %c0_4 = arith.constant 0 : index
    %4 = vector.load %arg4[%c0_3, %c0_4] : memref<1x128xf32, #tpu.memory_space<vmem>>, vector<1x128xf32>
    %5 = vector.broadcast %4 : vector<1x128xf32> to vector<16x128xf32>
    %6 = arith.addf %3, %5 : vector<16x128xf32>
    %c0_5 = arith.constant 0 : index
    %c0_6 = arith.constant 0 : index
    %7 = vector.load %arg5[%c0_5, %c0_6] : memref<16x128xf32, #tpu.memory_space<vmem>>, vector<16x128xf32>
    tpu.vector_store %arg5[%c0_5, %c0_6], %6 {strides = array<i32>} : memref<16x128xf32, #tpu.memory_space<vmem>>, vector<16x128xf32>,
    return
  }
  func.func @transform_0(%arg0: i32, %arg1: i32) -> (i32, i32) {
    %c0_i32 = arith.constant 0 : i32
    %c0_i32_0 = arith.constant 0 : i32
    return %arg0, %c0_i32 : i32, i32
  }
  func.func @transform_1(%arg0: i32, %arg1: i32) -> (i32, i32) {
    %c0_i32 = arith.constant 0 : i32
    %c0_i32_0 = arith.constant 0 : i32
    return %arg1, %c0_i32 : i32, i32
  }
  func.func @transform_2(%arg0: i32, %arg1: i32) -> (i32, i32) {
    %c0_i32 = arith.constant 0 : i32
    %c0_i32_0 = arith.constant 0 : i32
    return %c0_i32, %arg1 : i32, i32
  }
  func.func @transform_3(%arg0: i32, %arg1: i32) -> (i32, i32) {
    %c0_i32 = arith.constant 0 : i32
    return %arg0, %arg1 : i32, i32
  }
}

module attributes {stable_mosaic.version = 11 : i64} {
  func.func @kernel(%arg0: i32, %arg1: i32, %arg2: memref<16x32xf32, #tpu.memory_space<vmem>>, %arg3: memref<128x32xbf16, #tpu.memory_space<vmem>>, %arg4: memref<1x128xf32, #tpu.memory_space<vmem>>, %arg5: memref<16x128xf32, #tpu.memory_space<vmem>>) attributes {dimension_semantics = [#tpu.dimension_semantics<parallel>, #tpu.dimension_semantics<parallel>], iteration_bounds = array<i64: 1, 1>, scalar_prefetch = 0 : i64, scratch_operands = 0 : i64, tpu.core_type = #tpu.core_type<tc>, window_params = [{transform_indices = @transform_0, window_bounds = array<i64: 16, 32>}, {transform_indices = @transform_1, window_bounds = array<i64: 128, 32>}, {transform_indices = @transform_2, window_bounds = array<i64: 1, 128>}, {transform_indices = @transform_3, window_bounds = array<i64: 16, 128>}]} {
    %c0 = arith.constant 0 : index
    %c0_0 = arith.constant 0 : index
    %0 = vector.load %arg2[%c0, %c0_0] : memref<16x32xf32, #tpu.memory_space<vmem>>, vector<16x32xf32>
    %1 = arith.truncf %0 : vector<16x32xf32> to vector<16x32xbf16>
    %c0_1 = arith.constant 0 : index
    %c0_2 = arith.constant 0 : index
    %2 = vector.load %arg3[%c0_1, %c0_2] : memref<128x32xbf16, #tpu.memory_space<vmem>>, vector<128x32xbf16>
    %cst = arith.constant dense<0.000000e+00> : vector<16x128xf32>
    %3 = tpu.matmul %1, %2, %cst {dimension_numbers = #tpu.dot_dimension_numbers<[1], [1], [0], [0], [0, 0, 1, 0], [], []>} : vector<16x32xbf16>, vector<128x32xbf16>, vector<16x128xf32> -> vector<16x128xf32>
    %c0_3 = arith.constant 0 : index
    %c0_4 = arith.constant 0 : index
    %4 = vector.load %arg4[%c0_3, %c0_4] : memref<1x128xf32, #tpu.memory_space<vmem>>, vector<1x128xf32>
    %5 = vector.broadcast %4 : vector<1x128xf32> to vector<16x128xf32>
    %6 = arith.addf %3, %5 : vector<16x128xf32>
    %c0_5 = arith.constant 0 : index
    %c0_6 = arith.constant 0 : index
    %7 = vector.load %arg5[%c0_5, %c0_6] : memref<16x128xf32, #tpu.memory_space<vmem>>, vector<16x128xf32>
    tpu.vector_store %arg5[%c0_5, %c0_6], %6 {strides = array<i32>} : memref<16x128xf32, #tpu.memory_space<vmem>>, vector<16x128xf32>,
    return
  }
  func.func @transform_0(%arg0: i32, %arg1: i32) -> (i32, i32) {
    %c0_i32 = arith.constant 0 : i32
    %c0_i32_0 = arith.constant 0 : i32
    return %arg0, %c0_i32 : i32, i32
  }
  func.func @transform_1(%arg0: i32, %arg1: i32) -> (i32, i32) {
    %c0_i32 = arith.constant 0 : i32
    %c0_i32_0 = arith.constant 0 : i32
    return %arg1, %c0_i32 : i32, i32
  }
  func.func @transform_2(%arg0: i32, %arg1: i32) -> (i32, i32) {
    %c0_i32 = arith.constant 0 : i32
    %c0_i32_0 = arith.constant 0 : i32
    return %c0_i32, %arg1 : i32, i32
  }
  func.func @transform_3(%arg0: i32, %arg1: i32) -> (i32, i32) {
    %c0_i32 = arith.constant 0 : i32
    return %arg0, %arg1 : i32, i32
  }
}

</mosaic_0001>

<llo_original>
// kernel: tpu_custom_call.1
$region0: #{tpu_custom_call.1}
  #allocation0 [shape = 'u32[]', space=smem, size = 0x4, offset = 0x4, fixed_abs, tag = 'smem constant byte address 0x4 - core index']
  #allocation1 [shape = 'u32[144,128]{1,0:T(1,128)}', space=vmem, size = 0x12000, scoped, tag = 'internal scratch']
  %s0 = inlined_call_operand.vmem [shape: f32[16,32], index: 0, kind: input, shape index: {}]
  %s1 = inlined_call_operand.vmem [shape: bf16[128,32], index: 1, kind: input, shape index: {}]
  %s2 = inlined_call_operand.vmem [shape: f32[1,128], index: 2, kind: input, shape index: {}]
  %s3 = inlined_call_operand.hbm [shape: f32[16,128], index: 3, kind: output, shape index: {}]
  %s4 = sld [smem:[#allocation0]]
  $region22: #{tpu_custom_call.1} parent=0
    _
  %s6 = ssub.s32 1, %s4
  %s7 = scalar_select 0, %s6, %s4
  $region1: #{tpu_custom_call.1} parent=0
    #allocation2 [shape = 'u8[8192]{0}', space=vmem, size = 0x2000, scoped, tag = 'output window, operand 0, single buffered']
    #allocation3 [shape = 's32[1]{0}', space=sflag, size = 0x4, scoped, tag = 'scoped memory for tpu_custom_call.1']
    %8 = vsyncpa [#allocation3], 0
    // Predicated region
    $region2: #{tpu_custom_call.1} parent=1 // pred_check
      _
    $region3: #{tpu_custom_call.1} parent=1 // pred_check_branch
      %10 = sbr.rel (0) target = $region5
    $region4: #{tpu_custom_call.1} parent=1 // pred_region
      _
    $region5: #{tpu_custom_call.1} parent=1 // pred_fallthru
      _
    // Predicated region
    $region6: #{tpu_custom_call.1} parent=1 // pred_check
      _
    $region7: #{tpu_custom_call.1} parent=1 // pred_check_branch
      %12 = sbr.rel (0) target = $region9
    $region8: #{tpu_custom_call.1} parent=1 // pred_region
      _
    $region9: #{tpu_custom_call.1} parent=1 // pred_fallthru
      _
    // Predicated region
    $region10: #{tpu_custom_call.1} parent=1 // pred_check
      _
    $region11: #{tpu_custom_call.1} parent=1 // pred_check_branch
      %14 = sbr.rel (0) target = $region13
    $region12: #{tpu_custom_call.1} parent=1 // pred_region
      _
    $region13: #{tpu_custom_call.1} parent=1 // pred_fallthru
      _
    %v16 = vld [vmem:[%s0] sm:$0xff]
    %v17 = vld [vmem:[%s0 + $0x8] sm:$0xff]
    %v18 = vpack.c.bf16 %v17, %v16
    %v19 = vld [vmem:[%s1] sm:$0xf]
    %v20 = vld [vmem:[%s1 + $0x4] sm:$0xf]
    %v21 = vld [vmem:[%s1 + $0x8] sm:$0xf]
    %v22 = vld [vmem:[%s1 + $0xc] sm:$0xf]
    %v23 = vld [vmem:[%s1 + $0x10] sm:$0xf]
    %v24 = vld [vmem:[%s1 + $0x14] sm:$0xf]
    %v25 = vld [vmem:[%s1 + $0x18] sm:$0xf]
    %v26 = vld [vmem:[%s1 + $0x1c] sm:$0xf]
    %v27 = vld [vmem:[%s1 + $0x20] sm:$0xf]
    %v28 = vld [vmem:[%s1 + $0x24] sm:$0xf]
    %v29 = vld [vmem:[%s1 + $0x28] sm:$0xf]
    %v30 = vld [vmem:[%s1 + $0x2c] sm:$0xf]
    %v31 = vld [vmem:[%s1 + $0x30] sm:$0xf]
    %v32 = vld [vmem:[%s1 + $0x34] sm:$0xf]
    %v33 = vld [vmem:[%s1 + $0x38] sm:$0xf]
    %v34 = vld [vmem:[%s1 + $0x3c] sm:$0xf]
    %v35 = vld [vmem:[%s2] sm:$0x1]
    %v37 = vlaneseq
    %v38 = vshrl.u32 %v37, 7
    %v39 = vsub.s32 0, %v38
    %v40 = vrot.slane %v35, %v39
    %v58 = vunpack.c.l.b16 %v19
    %v59 = vunpack.c.l.b16 %v20
    %v60 = vunpack.c.l.b16 %v21
    %v61 = vunpack.c.l.b16 %v22
    %v62 = vunpack.c.l.b16 %v23
    %v63 = vunpack.c.l.b16 %v24
    %v64 = vunpack.c.l.b16 %v25
    %v65 = vunpack.c.l.b16 %v26
    %v66 = vunpack.c.l.b16 %v27
    %v67 = vunpack.c.l.b16 %v28
    %v68 = vunpack.c.l.b16 %v29
    %v69 = vunpack.c.l.b16 %v30
    %v70 = vunpack.c.l.b16 %v31
    %v71 = vunpack.c.l.b16 %v32
    %v72 = vunpack.c.l.b16 %v33
    %v73 = vunpack.c.l.b16 %v34
    %v74 = vpack.c.b16 %v59, %v58
    %v75 = vpack.c.b16 %v61, %v60
    %v76 = vpack.c.b16 %v63, %v62
    %v77 = vpack.c.b16 %v65, %v64
    %v78 = vpack.c.b16 %v67, %v66
    %v79 = vpack.c.b16 %v69, %v68
    %v80 = vpack.c.b16 %v71, %v70
    %v81 = vpack.c.b16 %v73, %v72
    %vm82 = vcmask 261120
    %v84 = vsel %vm82, %v18, 0
    %v87 = vsel %vm82, %v74, 0
    %v90 = vsel %vm82, %v75, 0
    %v93 = vsel %vm82, %v76, 0
    %v96 = vsel %vm82, %v77, 0
    %v99 = vsel %vm82, %v78, 0
    %v102 = vsel %vm82, %v79, 0
    %v105 = vsel %vm82, %v80, 0
    %v108 = vsel %vm82, %v81, 0
    %110 = vmatprep.subr.bf16.mxu0 0
    %111 = vmatpush1.bf16.xpose.msra.mxu0 %v87
    %112 = vmatprep.subr.bf16.mxu0 0
    %113 = vmatpush1.bf16.xpose.msra.mxu0 %v90
    %114 = vmatprep.subr.bf16.mxu0 0
    %115 = vmatpush1.bf16.xpose.msra.mxu0 %v93
    %116 = vmatprep.subr.bf16.mxu0 0
    %117 = vmatpush1.bf16.xpose.msra.mxu0 %v96
    %118 = vmatprep.subr.bf16.mxu0 0
    %119 = vmatpush1.bf16.xpose.msra.mxu0 %v99
    %120 = vmatprep.subr.bf16.mxu0 0
    %121 = vmatpush1.bf16.xpose.msra.mxu0 %v102
    %122 = vmatprep.subr.bf16.mxu0 0
    %123 = vmatpush1.bf16.xpose.msra.mxu0 %v105
    %124 = vmatprep.subr.bf16.mxu0 0
    %125 = vmatpush1.bf16.xpose.msra.mxu0 %v108
    %126 = vmatprep.subr.bf16.mxu0 0
    %127 = vmatpush1.bf16.xpose.msra.mxu0 0
    %128 = vmatprep.subr.bf16.mxu0 0
    %129 = vmatpush1.bf16.xpose.msra.mxu0 0
    %130 = vmatprep.subr.bf16.mxu0 0
    %131 = vmatpush1.bf16.xpose.msra.mxu0 0
    %132 = vmatprep.subr.bf16.mxu0 0
    %133 = vmatpush1.bf16.xpose.msra.mxu0 0
    %134 = vmatprep.subr.bf16.mxu0 0
    %135 = vmatpush1.bf16.xpose.msra.mxu0 0
    %136 = vmatprep.subr.bf16.mxu0 0
    %137 = vmatpush1.bf16.xpose.msra.mxu0 0
    %138 = vmatprep.subr.bf16.mxu0 0
    %139 = vmatpush1.bf16.xpose.msra.mxu0 0
    %140 = vmatprep.subr.bf16.mxu0 0
    %141 = vmatpush1.bf16.xpose.msra.mxu0 0
    %142 = vmatprep.mubr.bf16.mxu0 0
    %143 = vmatmul.mubr.bf16.gmra.mrb[0].mxu0 %v84
    %v144 = vpop.f32.mrb[0].mxu0
    %v145 = vadd.f32 %v40, %v144
    %v146 = vpop.f32.mrb[0].mxu0
    %v147 = vpop.f32.mrb[0].mxu0
    %v148 = vadd.f32 %v40, %v147
    %v149 = vpop.f32.mrb[0].mxu0
    %150 = vdwg.mxu0
    %151 = vst [vmem:[#allocation2] sm:$0xff] %v145
    %152 = vst [vmem:[#allocation2 + $0x8] sm:$0xff] %v148
    // Predicated region
    $region14: #{tpu_custom_call.1} parent=1 // pred_check
      _
    $region15: #{tpu_custom_call.1} parent=1 // pred_check_branch
      %154 = sbr.rel (0) target = $region17
    $region16: #{tpu_custom_call.1} parent=1 // pred_region
      %s156 = ssub.s32 256, 256
      %157 = vsyncadd [#allocation3], %s156
      %s158 = sshll.u32 [#allocation2], 4
      %s159 = int_to_ptr.vmem [resolvable:$true] %s158
      %164 = dma.vmem_to_hbm [thread:$0]  %s159, 256, %s3, [#allocation3], 128, 128, 8
    $region17: #{tpu_custom_call.1} parent=1 // pred_fallthru
      _
    // Predicated region
    $region18: #{tpu_custom_call.1} parent=1 // pred_check
      _
    $region19: #{tpu_custom_call.1} parent=1 // pred_check_branch
      %166 = sbr.rel (0) target = $region21
    $region20: #{tpu_custom_call.1} parent=1 // pred_region
      %167 = dma.done [#allocation3], 256
    $region21: #{tpu_custom_call.1} parent=1 // pred_fallthru
      _
    %168 = vsyncpa [#allocation3], 1

// kernel: tpu_custom_call.1
$region0: #{tpu_custom_call.1}
  #allocation0 [shape = 'u32[]', space=smem, size = 0x4, offset = 0x4, fixed_abs, tag = 'smem constant byte address 0x4 - core index']
  #allocation1 [shape = 'u32[144,128]{1,0:T(1,128)}', space=vmem, size = 0x12000, scoped, tag = 'internal scratch']
  %s0 = inlined_call_operand.vmem [shape: f32[16,32], index: 0, kind: input, shape index: {}]
  %s1 = inlined_call_operand.vmem [shape: bf16[128,32], index: 1, kind: input, shape index: {}]
  %s2 = inlined_call_operand.vmem [shape: f32[1,128], index: 2, kind: input, shape index: {}]
  %s3 = inlined_call_operand.hbm [shape: f32[16,128], index: 3, kind: output, shape index: {}]
  %s4 = sld [smem:[#allocation0]]
  $region22: #{tpu_custom_call.1} parent=0
    _
  %s6 = ssub.s32 1, %s4
  %s7 = scalar_select 0, %s6, %s4
  $region1: #{tpu_custom_call.1} parent=0
    #allocation2 [shape = 'u8[8192]{0}', space=vmem, size = 0x2000, scoped, tag = 'output window, operand 0, single buffered']
    #allocation3 [shape = 's32[1]{0}', space=sflag, size = 0x4, scoped, tag = 'scoped memory for tpu_custom_call.1']
    %8 = vsyncpa [#allocation3], 0
    // Predicated region
    $region2: #{tpu_custom_call.1} parent=1 // pred_check
      _
    $region3: #{tpu_custom_call.1} parent=1 // pred_check_branch
      %10 = sbr.rel (0) target = $region5
    $region4: #{tpu_custom_call.1} parent=1 // pred_region
      _
    $region5: #{tpu_custom_call.1} parent=1 // pred_fallthru
      _
    // Predicated region
    $region6: #{tpu_custom_call.1} parent=1 // pred_check
      _
    $region7: #{tpu_custom_call.1} parent=1 // pred_check_branch
      %12 = sbr.rel (0) target = $region9
    $region8: #{tpu_custom_call.1} parent=1 // pred_region
      _
    $region9: #{tpu_custom_call.1} parent=1 // pred_fallthru
      _
    // Predicated region
    $region10: #{tpu_custom_call.1} parent=1 // pred_check
      _
    $region11: #{tpu_custom_call.1} parent=1 // pred_check_branch
      %14 = sbr.rel (0) target = $region13
    $region12: #{tpu_custom_call.1} parent=1 // pred_region
      _
    $region13: #{tpu_custom_call.1} parent=1 // pred_fallthru
      _
    %v16 = vld [vmem:[%s0] sm:$0xff]
    %v17 = vld [vmem:[%s0 + $0x8] sm:$0xff]
    %v18 = vpack.c.bf16 %v17, %v16
    %v19 = vld [vmem:[%s1] sm:$0xf]
    %v20 = vld [vmem:[%s1 + $0x4] sm:$0xf]
    %v21 = vld [vmem:[%s1 + $0x8] sm:$0xf]
    %v22 = vld [vmem:[%s1 + $0xc] sm:$0xf]
    %v23 = vld [vmem:[%s1 + $0x10] sm:$0xf]
    %v24 = vld [vmem:[%s1 + $0x14] sm:$0xf]
    %v25 = vld [vmem:[%s1 + $0x18] sm:$0xf]
    %v26 = vld [vmem:[%s1 + $0x1c] sm:$0xf]
    %v27 = vld [vmem:[%s1 + $0x20] sm:$0xf]
    %v28 = vld [vmem:[%s1 + $0x24] sm:$0xf]
    %v29 = vld [vmem:[%s1 + $0x28] sm:$0xf]
    %v30 = vld [vmem:[%s1 + $0x2c] sm:$0xf]
    %v31 = vld [vmem:[%s1 + $0x30] sm:$0xf]
    %v32 = vld [vmem:[%s1 + $0x34] sm:$0xf]
    %v33 = vld [vmem:[%s1 + $0x38] sm:$0xf]
    %v34 = vld [vmem:[%s1 + $0x3c] sm:$0xf]
    %v35 = vld [vmem:[%s2] sm:$0x1]
    %v37 = vlaneseq
    %v38 = vshrl.u32 %v37, 7
    %v39 = vsub.s32 0, %v38
    %v40 = vrot.slane %v35, %v39
    %v58 = vunpack.c.l.b16 %v19
    %v59 = vunpack.c.l.b16 %v20
    %v60 = vunpack.c.l.b16 %v21
    %v61 = vunpack.c.l.b16 %v22
    %v62 = vunpack.c.l.b16 %v23
    %v63 = vunpack.c.l.b16 %v24
    %v64 = vunpack.c.l.b16 %v25
    %v65 = vunpack.c.l.b16 %v26
    %v66 = vunpack.c.l.b16 %v27
    %v67 = vunpack.c.l.b16 %v28
    %v68 = vunpack.c.l.b16 %v29
    %v69 = vunpack.c.l.b16 %v30
    %v70 = vunpack.c.l.b16 %v31
    %v71 = vunpack.c.l.b16 %v32
    %v72 = vunpack.c.l.b16 %v33
    %v73 = vunpack.c.l.b16 %v34
    %v74 = vpack.c.b16 %v59, %v58
    %v75 = vpack.c.b16 %v61, %v60
    %v76 = vpack.c.b16 %v63, %v62
    %v77 = vpack.c.b16 %v65, %v64
    %v78 = vpack.c.b16 %v67, %v66
    %v79 = vpack.c.b16 %v69, %v68
    %v80 = vpack.c.b16 %v71, %v70
    %v81 = vpack.c.b16 %v73, %v72
    %vm82 = vcmask 261120
    %v84 = vsel %vm82, %v18, 0
    %v87 = vsel %vm82, %v74, 0
    %v90 = vsel %vm82, %v75, 0
    %v93 = vsel %vm82, %v76, 0
    %v96 = vsel %vm82, %v77, 0
    %v99 = vsel %vm82, %v78, 0
    %v102 = vsel %vm82, %v79, 0
    %v105 = vsel %vm82, %v80, 0
    %v108 = vsel %vm82, %v81, 0
    %110 = vmatprep.subr.bf16.mxu0 0
    %111 = vmatpush1.bf16.xpose.msra.mxu0 %v87
    %112 = vmatprep.subr.bf16.mxu0 0
    %113 = vmatpush1.bf16.xpose.msra.mxu0 %v90
    %114 = vmatprep.subr.bf16.mxu0 0
    %115 = vmatpush1.bf16.xpose.msra.mxu0 %v93
    %116 = vmatprep.subr.bf16.mxu0 0
    %117 = vmatpush1.bf16.xpose.msra.mxu0 %v96
    %118 = vmatprep.subr.bf16.mxu0 0
    %119 = vmatpush1.bf16.xpose.msra.mxu0 %v99
    %120 = vmatprep.subr.bf16.mxu0 0
    %121 = vmatpush1.bf16.xpose.msra.mxu0 %v102
    %122 = vmatprep.subr.bf16.mxu0 0
    %123 = vmatpush1.bf16.xpose.msra.mxu0 %v105
    %124 = vmatprep.subr.bf16.mxu0 0
    %125 = vmatpush1.bf16.xpose.msra.mxu0 %v108
    %126 = vmatprep.subr.bf16.mxu0 0
    %127 = vmatpush1.bf16.xpose.msra.mxu0 0
    %128 = vmatprep.subr.bf16.mxu0 0
    %129 = vmatpush1.bf16.xpose.msra.mxu0 0
    %130 = vmatprep.subr.bf16.mxu0 0
    %131 = vmatpush1.bf16.xpose.msra.mxu0 0
    %132 = vmatprep.subr.bf16.mxu0 0
    %133 = vmatpush1.bf16.xpose.msra.mxu0 0
    %134 = vmatprep.subr.bf16.mxu0 0
    %135 = vmatpush1.bf16.xpose.msra.mxu0 0
    %136 = vmatprep.subr.bf16.mxu0 0
    %137 = vmatpush1.bf16.xpose.msra.mxu0 0
    %138 = vmatprep.subr.bf16.mxu0 0
    %139 = vmatpush1.bf16.xpose.msra.mxu0 0
    %140 = vmatprep.subr.bf16.mxu0 0
    %141 = vmatpush1.bf16.xpose.msra.mxu0 0
    %142 = vmatprep.mubr.bf16.mxu0 0
    %143 = vmatmul.mubr.bf16.gmra.mrb[0].mxu0 %v84
    %v144 = vpop.f32.mrb[0].mxu0
    %v145 = vadd.f32 %v40, %v144
    %v146 = vpop.f32.mrb[0].mxu0
    %v147 = vpop.f32.mrb[0].mxu0
    %v148 = vadd.f32 %v40, %v147
    %v149 = vpop.f32.mrb[0].mxu0
    %150 = vdwg.mxu0
    %151 = vst [vmem:[#allocation2] sm:$0xff] %v145
    %152 = vst [vmem:[#allocation2 + $0x8] sm:$0xff] %v148
    // Predicated region
    $region14: #{tpu_custom_call.1} parent=1 // pred_check
      _
    $region15: #{tpu_custom_call.1} parent=1 // pred_check_branch
      %154 = sbr.rel (0) target = $region17
    $region16: #{tpu_custom_call.1} parent=1 // pred_region
      %s156 = ssub.s32 256, 256
      %157 = vsyncadd [#allocation3], %s156
      %s158 = sshll.u32 [#allocation2], 4
      %s159 = int_to_ptr.vmem [resolvable:$true] %s158
      %164 = dma.vmem_to_hbm [thread:$0]  %s159, 256, %s3, [#allocation3], 128, 128, 8
    $region17: #{tpu_custom_call.1} parent=1 // pred_fallthru
      _
    // Predicated region
    $region18: #{tpu_custom_call.1} parent=1 // pred_check
      _
    $region19: #{tpu_custom_call.1} parent=1 // pred_check_branch
      %166 = sbr.rel (0) target = $region21
    $region20: #{tpu_custom_call.1} parent=1 // pred_region
      %167 = dma.done [#allocation3], 256
    $region21: #{tpu_custom_call.1} parent=1 // pred_fallthru
      _
    %168 = vsyncpa [#allocation3], 1

</llo_original>
